<compile_context>
chip_gen: v7x
topology: tpu7x:2x2x1
jax: 0.10.0
libtpu: 0.0.40
codegen_flags: <defaults>
</compile_context>

<pallas_src>
import functools
import math

import jax
import jax.numpy as jnp
from jax.experimental import pallas as pl


def _cross_attention_kernel(x_ref, w_ref, b_ref, hs_ref, he_ref, wo_ref,
                            bo_ref, o_ref, *, tokens_per_group, dq, dk, dv):
    f32 = jnp.float32
    T = x_ref.shape[0]            # T = B*S*N flattened tokens
    N = tokens_per_group
    G = T // N                    # G = B*S groups (one query token per group)
    H = hs_ref.shape[1]

    # --- one fused MXU dot: q|k|v projection of every token ----------------
    # (the 1/sqrt(dk_h) softmax scale is pre-folded into the q columns)
    proj = (jnp.dot(x_ref[...], w_ref[...], preferred_element_type=f32)
            + b_ref[...])                               # (T, dq+dk+dv)
    p3 = proj.reshape(G, N, dq + dk + dv)

    # --- head-batched logits ------------------------------------------------
    # logits[g, n, h] = sum_d q[g, token0, h*dk_h+d] * k[g, n, h*dk_h+d]
    # Query of each group (token 0) broadcast over its N tokens (sublane
    # broadcast), then summed per head with a block-diagonal (dk, H) matmul.
    qk = p3[:, 0:1, 0:dq] * p3[:, :, dq:dq + dk]        # (G, N, dk)
    logits = jnp.dot(qk.reshape(T, dk), hs_ref[...],
                     preferred_element_type=f32).reshape(G, N, H)

    # --- softmax over the N tokens of each group (heads stay in lanes) -----
    m = jnp.max(logits, axis=1, keepdims=True)           # (G, 1, H)
    e = jnp.exp(logits - m)
    s = jnp.sum(e, axis=1, keepdims=True)                # (G, 1, H)
    # TODO(synk): approx reciprocal -> probabilities sum to 1 +/- ~1e-3; use
    # approx=False (or a final renorm) if the 2e-3 tolerance is tightened.
    p = e * pl.reciprocal(s, approx=True)                # (G, N, H)

    # --- attention-weighted values, heads already in concat order ----------
    w_exp = jnp.dot(p.reshape(T, H), he_ref[...],
                    preferred_element_type=f32).reshape(G, N, dv)
    ctx = jnp.sum(w_exp * p3[:, :, dq + dk:], axis=1)    # (G, dv)

    # --- output projection: one lane-dense (G, d_model) slab ---------------
    out = jnp.dot(ctx, wo_ref[...], preferred_element_type=f32) + bo_ref[...]
    o_ref[...] = out.astype(o_ref.dtype)


def prepare_params(params, num_heads):
    """One-time fusion of the nn.Linear weights into the kernel's operands.

    Done once at init (NOT per forward call) so no concat/iota XLA kernels are
    launched on the hot path.
    """
    wq, bq, wk, bk, wv, bv, wo, bo = params
    dq, dk, dv = wq.shape[1], wk.shape[1], wv.shape[1]
    assert dq % num_heads == 0, (dq, num_heads)
    assert dk % num_heads == 0, (dk, num_heads)
    assert dv % num_heads == 0, (dv, num_heads)
    dk_h, dv_h = dk // num_heads, dv // num_heads
    scale = 1.0 / math.sqrt(dk_h)

    # Fused projection weight: columns are [q (scaled) | k | v].
    w_fused = jnp.concatenate([wq * scale, wk, wv], axis=1)   # (D, dq+dk+dv)
    b_fused = jnp.concatenate([bq * scale, bk, bv], axis=1)   # (1, dq+dk+dv)

    # Block-diagonal head indicators (tiny constants, built once).
    head_sum = (jnp.arange(dk)[:, None] // dk_h
                == jnp.arange(num_heads)[None, :]).astype(jnp.float32)   # (dk, H)
    head_expand = (jnp.arange(num_heads)[:, None]
                   == jnp.arange(dv)[None, :] // dv_h).astype(jnp.float32)  # (H, dv)
    return (w_fused, b_fused, head_sum, head_expand, wo, bo)


@jax.jit
def cross_attention_forward(x, fused_params):
    """x: (B, S, N, D) float32. Returns (B, S, 1, d_model).

    The query of each (b, s) group is token 0 along N (att_dim=2 semantics of
    the PyTorch module).
    """
    w_fused, b_fused, head_sum, head_expand, wo, bo = fused_params
    B, S, N, D = x.shape
    d_model = wo.shape[1]
    dk, _ = head_sum.shape
    dv = head_expand.shape[1]
    dq = w_fused.shape[1] - dk - dv
    T, G = B * S * N, B * S

    kernel = functools.partial(
        _cross_attention_kernel, tokens_per_group=N, dq=dq, dk=dk, dv=dv)

    # Single gridless invocation: all operands are whole-array VMEM blocks.
    # TODO(synk): for much larger B*S, tile the flattened group axis with a
    # 1-D "parallel" grid (lets v7x's two TensorCores shard it) and size the
    # block per generation (v7x has 64 MiB VMEM vs 128 MiB on v5e/v6e); a
    # token-in-lanes (transposed) layout would further densify the VPU work,
    # but at this size the kernel is dispatch/latency bound.
    out2d = pl.pallas_call(
        kernel,
        out_shape=jax.ShapeDtypeStruct((G, d_model), x.dtype),
    )(x.reshape(T, D), w_fused, b_fused, head_sum, head_expand, wo, bo)
    return out2d.reshape(B, S, 1, d_model)


def cross_attention_reference(x, params, num_heads):
    """Pure-JAX replica of the PyTorch forward (att_dim=2, low-rank projections)."""
    wq, bq, wk, bk, wv, bv, wo, bo = params
    B, S, N, D = x.shape
    q = x[:, :, 0:1, :] @ wq + bq          # (B, S, 1, dq_out)
    k = x @ wk + bk                        # (B, S, N, dk_out)
    v = x @ wv + bv                        # (B, S, N, dv_out)

    def split_heads(t):                    # (B,S,L,F) -> (B,S,H,L,F/H)
        b, s, l, f = t.shape
        return t.reshape(b, s, l, num_heads, f // num_heads).transpose(0, 1, 3, 2, 4)

    qh = split_heads(q).transpose(0, 2, 1, 3, 4)   # (B,H,S,1,dq)
    kh = split_heads(k).transpose(0, 2, 1, 3, 4)   # (B,H,S,N,dk)
    vh = split_heads(v).transpose(0, 2, 1, 3, 4)   # (B,H,S,N,dv)

    dk = kh.shape[-1]
    logits = jnp.einsum('bhsqd,bhskd->bhsqk', qh, kh) / math.sqrt(dk)
    attn = jax.nn.softmax(logits, axis=-1)
    out = jnp.einsum('bhsqk,bhskd->bhsqd', attn, vh)          # (B,H,S,1,dv)
    out = out.transpose(0, 2, 3, 1, 4).reshape(B, S, 1, -1)   # (B,S,1,dv_out)
    return out @ wo + bo                                      # (B,S,1,d_model)


def init_params(key, d_model, dq_out, dk_out, dv_out):
    ks = jax.random.split(key, 8)
    scale = 0.02
    wq = scale * jax.random.normal(ks[0], (d_model, dq_out), jnp.float32)
    bq = scale * jax.random.normal(ks[1], (1, dq_out), jnp.float32)
    wk = scale * jax.random.normal(ks[2], (d_model, dk_out), jnp.float32)
    bk = scale * jax.random.normal(ks[3], (1, dk_out), jnp.float32)
    wv = scale * jax.random.normal(ks[4], (d_model, dv_out), jnp.float32)
    bv = scale * jax.random.normal(ks[5], (1, dv_out), jnp.float32)
    wo = scale * jax.random.normal(ks[6], (dv_out, d_model), jnp.float32)
    bo = scale * jax.random.normal(ks[7], (1, d_model), jnp.float32)
    return (wq, bq, wk, bk, wv, bv, wo, bo)


if __name__ == "__main__":
    # Module config: num_heads=4, d_model=32, dq_out=dk_out=dv_out=16, att_dim=2
    num_heads = 4
    d_model = 32
    dq_out = dk_out = dv_out = 16
    B, S, N = 2, 4, 16

    key = jax.random.PRNGKey(0)
    kx, kp = jax.random.split(key)
    x = jax.random.normal(kx, (B, S, N, d_model), jnp.float32)
    params = init_params(kp, d_model, dq_out, dk_out, dv_out)
    fused = prepare_params(params, num_heads)   # one-time weight/const fusion

    out = cross_attention_forward(x, fused)
    out = jax.block_until_ready(out)

    ref = cross_attention_reference(x, params, num_heads)
    err = float(jnp.max(jnp.abs(out - ref)))
    assert out.shape == (B, S, 1, d_model), out.shape
    assert err < 2e-3, f"max abs err {err}"
    print("KERNEL_OK")
</pallas_src>

<mosaic_0001>
module attributes {stable_mosaic.version = 11 : i64} {
  func.func @_cross_attention_kernel(%arg0: memref<128x32xf32, #tpu.memory_space<vmem>>, %arg1: memref<32x48xf32, #tpu.memory_space<vmem>>, %arg2: memref<1x48xf32, #tpu.memory_space<vmem>>, %arg3: memref<16x4xf32, #tpu.memory_space<vmem>>, %arg4: memref<4x16xf32, #tpu.memory_space<vmem>>, %arg5: memref<16x32xf32, #tpu.memory_space<vmem>>, %arg6: memref<1x32xf32, #tpu.memory_space<vmem>>, %arg7: memref<8x32xf32, #tpu.memory_space<vmem>>) attributes {dimension_semantics = [], scalar_prefetch = 0 : i64, scratch_operands = 0 : i64, tpu.core_type = #tpu.core_type<tc>} {
    %c0 = arith.constant 0 : index
    %c0_0 = arith.constant 0 : index
    %0 = vector.load %arg0[%c0, %c0_0] : memref<128x32xf32, #tpu.memory_space<vmem>>, vector<128x32xf32>
    %c0_1 = arith.constant 0 : index
    %c0_2 = arith.constant 0 : index
    %1 = vector.load %arg1[%c0_1, %c0_2] : memref<32x48xf32, #tpu.memory_space<vmem>>, vector<32x48xf32>
    %cst = arith.constant dense<0.000000e+00> : vector<128x48xf32>
    %2 = tpu.matmul %0, %1, %cst {dimension_numbers = #tpu.dot_dimension_numbers<[1], [0], [0], [1], [0, 0, 1, 1], [], []>} : vector<128x32xf32>, vector<32x48xf32>, vector<128x48xf32> -> vector<128x48xf32>
    %c0_3 = arith.constant 0 : index
    %c0_4 = arith.constant 0 : index
    %3 = vector.load %arg2[%c0_3, %c0_4] : memref<1x48xf32, #tpu.memory_space<vmem>>, vector<1x48xf32>
    %4 = vector.broadcast %3 : vector<1x48xf32> to vector<128x48xf32>
    %5 = arith.addf %2, %4 : vector<128x48xf32>
    %6 = vector.shape_cast %5 : vector<128x48xf32> to vector<8x16x48xf32>
    %7 = vector.extract_strided_slice %6 {offsets = [0, 0, 0], sizes = [8, 1, 16], strides = [1, 1, 1]} : vector<8x16x48xf32> to vector<8x1x16xf32>
    %8 = vector.extract_strided_slice %6 {offsets = [0, 0, 16], sizes = [8, 16, 16], strides = [1, 1, 1]} : vector<8x16x48xf32> to vector<8x16x16xf32>
    %9 = vector.broadcast %7 : vector<8x1x16xf32> to vector<8x16x16xf32>
    %10 = arith.mulf %9, %8 : vector<8x16x16xf32>
    %11 = vector.shape_cast %10 : vector<8x16x16xf32> to vector<128x16xf32>
    %c0_5 = arith.constant 0 : index
    %c0_6 = arith.constant 0 : index
    %12 = vector.load %arg3[%c0_5, %c0_6] : memref<16x4xf32, #tpu.memory_space<vmem>>, vector<16x4xf32>
    %cst_7 = arith.constant dense<0.000000e+00> : vector<128x4xf32>
    %13 = tpu.matmul %11, %12, %cst_7 {dimension_numbers = #tpu.dot_dimension_numbers<[1], [0], [0], [1], [0, 0, 1, 1], [], []>} : vector<128x16xf32>, vector<16x4xf32>, vector<128x4xf32> -> vector<128x4xf32>
    %14 = vector.shape_cast %13 : vector<128x4xf32> to vector<8x16x4xf32>
    %cst_8 = arith.constant dense<0xFF800000> : vector<8x4xf32>
    %15 = vector.multi_reduction <maximumf>, %14, %cst_8 [1] : vector<8x16x4xf32> to vector<8x4xf32>
    %16 = vector.shape_cast %15 : vector<8x4xf32> to vector<8x1x4xf32>
    %17 = vector.broadcast %16 : vector<8x1x4xf32> to vector<8x16x4xf32>
    %18 = arith.subf %14, %17 : vector<8x16x4xf32>
    %19 = math.exp %18 : vector<8x16x4xf32>
    %cst_9 = arith.constant dense<0.000000e+00> : vector<8x4xf32>
    %20 = vector.multi_reduction <add>, %19, %cst_9 [1] : vector<8x16x4xf32> to vector<8x4xf32>
    %21 = vector.shape_cast %20 : vector<8x4xf32> to vector<8x1x4xf32>
    %22 = tpu.reciprocal %21 {approx = true} : vector<8x1x4xf32> -> vector<8x1x4xf32>
    %23 = vector.broadcast %22 : vector<8x1x4xf32> to vector<8x16x4xf32>
    %24 = arith.mulf %19, %23 : vector<8x16x4xf32>
    %25 = vector.shape_cast %24 : vector<8x16x4xf32> to vector<128x4xf32>
    %c0_10 = arith.constant 0 : index
    %c0_11 = arith.constant 0 : index
    %26 = vector.load %arg4[%c0_10, %c0_11] : memref<4x16xf32, #tpu.memory_space<vmem>>, vector<4x16xf32>
    %cst_12 = arith.constant dense<0.000000e+00> : vector<128x16xf32>
    %27 = tpu.matmul %25, %26, %cst_12 {dimension_numbers = #tpu.dot_dimension_numbers<[1], [0], [0], [1], [0, 0, 1, 1], [], []>} : vector<128x4xf32>, vector<4x16xf32>, vector<128x16xf32> -> vector<128x16xf32>
    %28 = vector.shape_cast %27 : vector<128x16xf32> to vector<8x16x16xf32>
    %29 = vector.extract_strided_slice %6 {offsets = [0, 0, 32], sizes = [8, 16, 16], strides = [1, 1, 1]} : vector<8x16x48xf32> to vector<8x16x16xf32>
    %30 = arith.mulf %28, %29 : vector<8x16x16xf32>
    %cst_13 = arith.constant dense<0.000000e+00> : vector<8x16xf32>
    %31 = vector.multi_reduction <add>, %30, %cst_13 [1] : vector<8x16x16xf32> to vector<8x16xf32>
    %c0_14 = arith.constant 0 : index
    %c0_15 = arith.constant 0 : index
    %32 = vector.load %arg5[%c0_14, %c0_15] : memref<16x32xf32, #tpu.memory_space<vmem>>, vector<16x32xf32>
    %cst_16 = arith.constant dense<0.000000e+00> : vector<8x32xf32>
    %33 = tpu.matmul %31, %32, %cst_16 {dimension_numbers = #tpu.dot_dimension_numbers<[1], [0], [0], [1], [0, 0, 1, 1], [], []>} : vector<8x16xf32>, vector<16x32xf32>, vector<8x32xf32> -> vector<8x32xf32>
    %c0_17 = arith.constant 0 : index
    %c0_18 = arith.constant 0 : index
    %34 = vector.load %arg6[%c0_17, %c0_18] : memref<1x32xf32, #tpu.memory_space<vmem>>, vector<1x32xf32>
    %35 = vector.broadcast %34 : vector<1x32xf32> to vector<8x32xf32>
    %36 = arith.addf %33, %35 : vector<8x32xf32>
    %c0_19 = arith.constant 0 : index
    %c0_20 = arith.constant 0 : index
    %37 = vector.load %arg7[%c0_19, %c0_20] : memref<8x32xf32, #tpu.memory_space<vmem>>, vector<8x32xf32>
    tpu.vector_store %arg7[%c0_19, %c0_20], %36 {strides = array<i32>} : memref<8x32xf32, #tpu.memory_space<vmem>>, vector<8x32xf32>,
    return
  }
}

</mosaic_0001>

<llo_original>
// kernel: cross_attention_forward.1
$region0: #{cross_attention_forward.1}
  #allocation0 [shape = 'u32[]', space=smem, size = 0x4, offset = 0x4, fixed_abs, tag = 'smem constant byte address 0x4 - core index']
  #allocation1 [shape = 'u32[144,128]{1,0:T(1,128)}', space=vmem, size = 0x12000, scoped, tag = 'internal scratch']
  %s0 = inlined_call_operand.hbm [shape: f32[128,32], index: 0, kind: input, shape index: {}]
  %s1 = inlined_call_operand.hbm [shape: f32[32,48], index: 1, kind: input, shape index: {}]
  %s2 = inlined_call_operand.vmem [shape: f32[1,48], index: 2, kind: input, shape index: {}]
  %s3 = inlined_call_operand.vmem [shape: f32[16,4], index: 3, kind: input, shape index: {}]
  %s4 = inlined_call_operand.vmem [shape: f32[4,16], index: 4, kind: input, shape index: {}]
  %s5 = inlined_call_operand.vmem [shape: f32[16,32], index: 5, kind: input, shape index: {}]
  %s6 = inlined_call_operand.vmem [shape: f32[1,32], index: 6, kind: input, shape index: {}]
  %s7 = inlined_call_operand.hbm [shape: f32[8,32], index: 7, kind: output, shape index: {}]
  %s8 = sld [smem:[#allocation0]]
  $region46: #{cross_attention_forward.1} parent=0
    _
  %s10 = ssub.s32 1, %s8
  %s11 = scalar_select 0, %s10, %s8
  $region1: #{cross_attention_forward.1} parent=0
    #allocation2 [shape = 'u8[65536]{0}', space=vmem, size = 0x10000, scoped, tag = 'input window, operand 0, single buffered']
    #allocation3 [shape = 's32[1]{0}', space=sflag, size = 0x4, scoped, tag = 'scoped memory for cross_attention_forward.1']
    #allocation4 [shape = 's32[1]{0}', space=sflag, size = 0x4, scoped, tag = 'scoped memory for cross_attention_forward.1']
    #allocation5 [shape = 'u8[16384]{0}', space=vmem, size = 0x4000, scoped, tag = 'input window, operand 1, single buffered']
    #allocation6 [shape = 's32[1]{0}', space=sflag, size = 0x4, scoped, tag = 'scoped memory for cross_attention_forward.1']
    #allocation7 [shape = 'u8[4096]{0}', space=vmem, size = 0x1000, scoped, tag = 'output window, operand 0, single buffered']
    %12 = vsyncpa [#allocation3], 0
    %13 = vsyncpa [#allocation6], 0
    %14 = vsyncpa [#allocation4], 0
    // Predicated region
    $region2: #{cross_attention_forward.1} parent=1 // pred_check
      _
    $region3: #{cross_attention_forward.1} parent=1 // pred_check_branch
      %16 = sbr.rel (0) target = $region5
    $region4: #{cross_attention_forward.1} parent=1 // pred_region
      %s18 = ssub.s32 2048, 2048
      %19 = vsyncadd [#allocation3], %s18
      %s20 = sshll.u32 [#allocation2], 4
      %s21 = int_to_ptr.vmem [resolvable:$true] %s20
      %26 = dma.hbm_to_vmem [thread:$0]  %s0, 2048, %s21, [#allocation3], 128, 128, 8
    $region5: #{cross_attention_forward.1} parent=1 // pred_fallthru
      _
    // Predicated region
    $region6: #{cross_attention_forward.1} parent=1 // pred_check
      _
    $region7: #{cross_attention_forward.1} parent=1 // pred_check_branch
      %28 = sbr.rel (0) target = $region9
    $region8: #{cross_attention_forward.1} parent=1 // pred_region
      %s30 = ssub.s32 512, 512
      %31 = vsyncadd [#allocation6], %s30
      %s32 = sshll.u32 [#allocation5], 4
      %s33 = int_to_ptr.vmem [resolvable:$true] %s32
      %38 = dma.hbm_to_vmem [thread:$0]  %s1, 512, %s33, [#allocation6], 128, 128, 8
    $region9: #{cross_attention_forward.1} parent=1 // pred_fallthru
      _
    // Predicated region
    $region10: #{cross_attention_forward.1} parent=1 // pred_check
      _
    $region11: #{cross_attention_forward.1} parent=1 // pred_check_branch
      %40 = sbr.rel (0) target = $region13
    $region12: #{cross_attention_forward.1} parent=1 // pred_region
      _
    $region13: #{cross_attention_forward.1} parent=1 // pred_fallthru
      _
    // Predicated region
    $region14: #{cross_attention_forward.1} parent=1 // pred_check
      _
    $region15: #{cross_attention_forward.1} parent=1 // pred_check_branch
      %42 = sbr.rel (0) target = $region17
    $region16: #{cross_attention_forward.1} parent=1 // pred_region
      _
    $region17: #{cross_attention_forward.1} parent=1 // pred_fallthru
      _
    // Predicated region
    $region18: #{cross_attention_forward.1} parent=1 // pred_check
      _
    $region19: #{cross_attention_forward.1} parent=1 // pred_check_branch
      %44 = sbr.rel (0) target = $region21
    $region20: #{cross_attention_forward.1} parent=1 // pred_region
      _
    $region21: #{cross_attention_forward.1} parent=1 // pred_fallthru
      _
    // Predicated region
    $region22: #{cross_attention_forward.1} parent=1 // pred_check
      _
    $region23: #{cross_attention_forward.1} parent=1 // pred_check_branch
      %46 = sbr.rel (0) target = $region25
    $region24: #{cross_attention_forward.1} parent=1 // pred_region
      _
    $region25: #{cross_attention_forward.1} parent=1 // pred_fallthru
      _
    // Predicated region
    $region26: #{cross_attention_forward.1} parent=1 // pred_check
      _
    $region27: #{cross_attention_forward.1} parent=1 // pred_check_branch
      %48 = sbr.rel (0) target = $region29
    $region28: #{cross_attention_forward.1} parent=1 // pred_region
      _
    $region29: #{cross_attention_forward.1} parent=1 // pred_fallthru
      _
    // Predicated region
    $region30: #{cross_attention_forward.1} parent=1 // pred_check
      _
    $region31: #{cross_attention_forward.1} parent=1 // pred_check_branch
      %50 = sbr.rel (0) target = $region33
    $region32: #{cross_attention_forward.1} parent=1 // pred_region
      %51 = dma.done [#allocation3], 2048
    $region33: #{cross_attention_forward.1} parent=1 // pred_fallthru
      _
    // Predicated region
    $region34: #{cross_attention_forward.1} parent=1 // pred_check
      _
    $region35: #{cross_attention_forward.1} parent=1 // pred_check_branch
      %53 = sbr.rel (0) target = $region37
    $region36: #{cross_attention_forward.1} parent=1 // pred_region
      %54 = dma.done [#allocation6], 512
    $region37: #{cross_attention_forward.1} parent=1 // pred_fallthru
      _
    %v55 = vld [vmem:[#allocation2] sm:$0xff]
    %v56 = vld [vmem:[#allocation2 + $0x8] sm:$0xff]
    %v57 = vld [vmem:[#allocation2 + $0x10] sm:$0xff]
    %v58 = vld [vmem:[#allocation2 + $0x18] sm:$0xff]
    %v59 = vld [vmem:[#allocation2 + $0x20] sm:$0xff]
    %v60 = vld [vmem:[#allocation2 + $0x28] sm:$0xff]
    %v61 = vld [vmem:[#allocation2 + $0x30] sm:$0xff]
    %v62 = vld [vmem:[#allocation2 + $0x38] sm:$0xff]
    %v63 = vld [vmem:[#allocation2 + $0x40] sm:$0xff]
    %v64 = vld [vmem:[#allocation2 + $0x48] sm:$0xff]
    %v65 = vld [vmem:[#allocation2 + $0x50] sm:$0xff]
    %v66 = vld [vmem:[#allocation2 + $0x58] sm:$0xff]
    %v67 = vld [vmem:[#allocation2 + $0x60] sm:$0xff]
    %v68 = vld [vmem:[#allocation2 + $0x68] sm:$0xff]
    %v69 = vld [vmem:[#allocation2 + $0x70] sm:$0xff]
    %v70 = vld [vmem:[#allocation2 + $0x78] sm:$0xff]
    %v71 = vld [vmem:[#allocation5] sm:$0xff]
    %v72 = vld [vmem:[#allocation5 + $0x8] sm:$0xff]
    %v73 = vld [vmem:[#allocation5 + $0x10] sm:$0xff]
    %v74 = vld [vmem:[#allocation5 + $0x18] sm:$0xff]
    %v75 = vld [vmem:[%s2] sm:$0x1]
    %v77 = vlaneseq
    %v78 = vshrl.u32 %v77, 7
    %v79 = vsub.s32 0, %v78
    %v80 = vrot.slane %v75, %v79
    %vm82 = vcmask 261120
    %v84 = vsel %vm82, %v55, 0
    %v87 = vsel %vm82, %v56, 0
    %v90 = vsel %vm82, %v57, 0
    %v93 = vsel %vm82, %v58, 0
    %v96 = vsel %vm82, %v59, 0
    %v99 = vsel %vm82, %v60, 0
    %v102 = vsel %vm82, %v61, 0
    %v105 = vsel %vm82, %v62, 0
    %v108 = vsel %vm82, %v63, 0
    %v111 = vsel %vm82, %v64, 0
    %v114 = vsel %vm82, %v65, 0
    %v117 = vsel %vm82, %v66, 0
    %v120 = vsel %vm82, %v67, 0
    %v123 = vsel %vm82, %v68, 0
    %v126 = vsel %vm82, %v69, 0
    %v129 = vsel %vm82, %v70, 0
    %131 = vmatprep.subr.mxu0 0.0
    %132 = vmatpush1.msra.mxu0 %v71
    %133 = vmatprep.subr.mxu0 0.0
    %134 = vmatpush1.msra.mxu0 %v72
    %135 = vmatprep.subr.mxu0 0.0
    %136 = vmatpush1.msra.mxu0 %v73
    %137 = vmatprep.subr.mxu0 0.0
    %138 = vmatpush1.msra.mxu0 %v74
    %139 = vmatprep.subr.mxu0 0.0
    %140 = vmatpush1.msra.mxu0 0.0
    %141 = vmatprep.subr.mxu0 0.0
    %142 = vmatpush1.msra.mxu0 0.0
    %143 = vmatprep.subr.mxu0 0.0
    %144 = vmatpush1.msra.mxu0 0.0
    %145 = vmatprep.subr.mxu0 0.0
    %146 = vmatpush1.msra.mxu0 0.0
    %147 = vmatprep.subr.mxu0 0.0
    %148 = vmatpush1.msra.mxu0 0.0
    %149 = vmatprep.subr.mxu0 0.0
    %150 = vmatpush1.msra.mxu0 0.0
    %151 = vmatprep.subr.mxu0 0.0
    %152 = vmatpush1.msra.mxu0 0.0
    %153 = vmatprep.subr.mxu0 0.0
    %154 = vmatpush1.msra.mxu0 0.0
    %155 = vmatprep.subr.mxu0 0.0
    %156 = vmatpush1.msra.mxu0 0.0
    %157 = vmatprep.subr.mxu0 0.0
    %158 = vmatpush1.msra.mxu0 0.0
    %159 = vmatprep.subr.mxu0 0.0
    %160 = vmatpush1.msra.mxu0 0.0
    %161 = vmatprep.subr.mxu0 0.0
    %162 = vmatpush1.msra.mxu0 0.0
    %163 = vmatprep.subr.mxu0 0.0
    %164 = vmatpush1.msra.mxu0 0.0
    %165 = vmatprep.subr.mxu0 0.0
    %166 = vmatpush1.msra.mxu0 0.0
    %167 = vmatprep.subr.mxu0 0.0
    %168 = vmatpush1.msra.mxu0 0.0
    %169 = vmatprep.subr.mxu0 0.0
    %170 = vmatpush1.msra.mxu0 0.0
    %171 = vmatprep.subr.mxu0 0.0
    %172 = vmatpush1.msra.mxu0 0.0
    %173 = vmatprep.subr.mxu0 0.0
    %174 = vmatpush1.msra.mxu0 0.0
    %175 = vmatprep.subr.mxu0 0.0
    %176 = vmatpush1.msra.mxu0 0.0
    %177 = vmatprep.subr.mxu0 0.0
    %178 = vmatpush1.msra.mxu0 0.0
    %179 = vmatprep.subr.mxu0 0.0
    %180 = vmatpush1.msra.mxu0 0.0
    %181 = vmatprep.subr.mxu0 0.0
    %182 = vmatpush1.msra.mxu0 0.0
    %183 = vmatprep.subr.mxu0 0.0
    %184 = vmatpush1.msra.mxu0 0.0
    %185 = vmatprep.subr.mxu0 0.0
    %186 = vmatpush1.msra.mxu0 0.0
    %187 = vmatprep.subr.mxu0 0.0
    %188 = vmatpush1.msra.mxu0 0.0
    %189 = vmatprep.subr.mxu0 0.0
    %190 = vmatpush1.msra.mxu0 0.0
    %191 = vmatprep.subr.mxu0 0.0
    %192 = vmatpush1.msra.mxu0 0.0
    %193 = vmatprep.subr.mxu0 0.0
    %194 = vmatpush1.msra.mxu0 0.0
    %195 = vmatprep.mubr.f32.mxu0 0.0
    %196 = vmatmul.mubr.f32.gmra.mrb[0].mxu0 %v84
    %v197 = vpop.f32.mrb[0].mxu0
    %v198 = vadd.f32 %v80, %v197
    %v199 = vpop.f32.mrb[0].mxu0
    %200 = vmatprep.mubr.f32.mxu0 0.0
    %201 = vmatmul.mubr.f32.gmra.mrb[0].mxu0 %v87
    %v202 = vpop.f32.mrb[0].mxu0
    %v203 = vadd.f32 %v80, %v202
    %v204 = vpop.f32.mrb[0].mxu0
    %205 = vmatprep.mubr.f32.mxu0 0.0
    %206 = vmatmul.mubr.f32.gmra.mrb[0].mxu0 %v90
    %v207 = vpop.f32.mrb[0].mxu0
    %v208 = vadd.f32 %v80, %v207
    %v209 = vpop.f32.mrb[0].mxu0
    %210 = vmatprep.mubr.f32.mxu0 0.0
    %211 = vmatmul.mubr.f32.gmra.mrb[0].mxu0 %v93
    %v212 = vpop.f32.mrb[0].mxu0
    %v213 = vadd.f32 %v80, %v212
    %v214 = vpop.f32.mrb[0].mxu0
    %215 = vmatprep.mubr.f32.mxu0 0.0
    %216 = vmatmul.mubr.f32.gmra.mrb[0].mxu0 %v96
    %v217 = vpop.f32.mrb[0].mxu0
    %v218 = vadd.f32 %v80, %v217
    %v219 = vpop.f32.mrb[0].mxu0
    %220 = vmatprep.mubr.f32.mxu0 0.0
    %221 = vmatmul.mubr.f32.gmra.mrb[0].mxu0 %v99
    %v222 = vpop.f32.mrb[0].mxu0
    %v223 = vadd.f32 %v80, %v222
    %v224 = vpop.f32.mrb[0].mxu0
    %225 = vmatprep.mubr.f32.mxu0 0.0
    %226 = vmatmul.mubr.f32.gmra.mrb[0].mxu0 %v102
    %v227 = vpop.f32.mrb[0].mxu0
    %v228 = vadd.f32 %v80, %v227
    %v229 = vpop.f32.mrb[0].mxu0
    %230 = vmatprep.mubr.f32.mxu0 0.0
    %231 = vmatmul.mubr.f32.gmra.mrb[0].mxu0 %v105
    %v232 = vpop.f32.mrb[0].mxu0
    %v233 = vadd.f32 %v80, %v232
    %v234 = vpop.f32.mrb[0].mxu0
    %235 = vmatprep.mubr.f32.mxu0 0.0
    %236 = vmatmul.mubr.f32.gmra.mrb[0].mxu0 %v108
    %v237 = vpop.f32.mrb[0].mxu0
    %v238 = vadd.f32 %v80, %v237
    %v239 = vpop.f32.mrb[0].mxu0
    %240 = vmatprep.mubr.f32.mxu0 0.0
    %241 = vmatmul.mubr.f32.gmra.mrb[0].mxu0 %v111
    %v242 = vpop.f32.mrb[0].mxu0
    %v243 = vadd.f32 %v80, %v242
    %v244 = vpop.f32.mrb[0].mxu0
    %245 = vmatprep.mubr.f32.mxu0 0.0
    %246 = vmatmul.mubr.f32.gmra.mrb[0].mxu0 %v114
    %v247 = vpop.f32.mrb[0].mxu0
    %v248 = vadd.f32 %v80, %v247
    %v249 = vpop.f32.mrb[0].mxu0
    %250 = vmatprep.mubr.f32.mxu0 0.0
    %251 = vmatmul.mubr.f32.gmra.mrb[0].mxu0 %v117
    %v252 = vpop.f32.mrb[0].mxu0
    %v253 = vadd.f32 %v80, %v252
    %v254 = vpop.f32.mrb[0].mxu0
    %255 = vmatprep.mubr.f32.mxu0 0.0
    %256 = vmatmul.mubr.f32.gmra.mrb[0].mxu0 %v120
    %v257 = vpop.f32.mrb[0].mxu0
    %v258 = vadd.f32 %v80, %v257
    %v259 = vpop.f32.mrb[0].mxu0
    %260 = vmatprep.mubr.f32.mxu0 0.0
    %261 = vmatmul.mubr.f32.gmra.mrb[0].mxu0 %v123
    %v262 = vpop.f32.mrb[0].mxu0
    %v263 = vadd.f32 %v80, %v262
    %v264 = vpop.f32.mrb[0].mxu0
    %265 = vmatprep.mubr.f32.mxu0 0.0
    %266 = vmatmul.mubr.f32.gmra.mrb[0].mxu0 %v126
    %v267 = vpop.f32.mrb[0].mxu0
    %v268 = vadd.f32 %v80, %v267
    %v269 = vpop.f32.mrb[0].mxu0
    %270 = vmatprep.mubr.f32.mxu0 0.0
    %271 = vmatmul.mubr.f32.gmra.mrb[0].mxu0 %v129
    %v272 = vpop.f32.mrb[0].mxu0
    %v273 = vadd.f32 %v80, %v272
    %v274 = vpop.f32.mrb[0].mxu0
    %275 = vdwg.mxu0
    %v276 = vlaneseq
    %v277 = vshrl.u32 %v276, 7
    %v278 = vsub.s32 0, %v277
    %v279 = vrot.slane %v198, %v278
    %v280 = vlaneseq
    %v281 = vshrl.u32 %v280, 7
    %v282 = vsub.s32 0, %v281
    %v283 = vrot.slane %v208, %v282
    %v284 = vlaneseq
    %v285 = vshrl.u32 %v284, 7
    %v286 = vsub.s32 0, %v285
    %v287 = vrot.slane %v218, %v286
    %v288 = vlaneseq
    %v289 = vshrl.u32 %v288, 7
    %v290 = vsub.s32 0, %v289
    %v291 = vrot.slane %v228, %v290
    %v292 = vlaneseq
    %v293 = vshrl.u32 %v292, 7
    %v294 = vsub.s32 0, %v293
    %v295 = vrot.slane %v238, %v294
    %v296 = vlaneseq
    %v297 = vshrl.u32 %v296, 7
    %v298 = vsub.s32 0, %v297
    %v299 = vrot.slane %v248, %v298
    %v300 = vlaneseq
    %v301 = vshrl.u32 %v300, 7
    %v302 = vsub.s32 0, %v301
    %v303 = vrot.slane %v258, %v302
    %v304 = vlaneseq
    %v305 = vshrl.u32 %v304, 7
    %v306 = vsub.s32 0, %v305
    %v307 = vrot.slane %v268, %v306
    %324 = vrot.lane.b32.xlu0 %v198, 112
    %v325 = vpop.permute.xlu0 %324
    %326 = vrot.lane.b32.xlu0 %v203, 112
    %v327 = vpop.permute.xlu0 %326
    %328 = vrot.lane.b32.xlu0 %v208, 112
    %v329 = vpop.permute.xlu0 %328
    %330 = vrot.lane.b32.xlu0 %v213, 112
    %v331 = vpop.permute.xlu0 %330
    %332 = vrot.lane.b32.xlu0 %v218, 112
    %v333 = vpop.permute.xlu0 %332
    %334 = vrot.lane.b32.xlu0 %v223, 112
    %v335 = vpop.permute.xlu0 %334
    %336 = vrot.lane.b32.xlu0 %v228, 112
    %v337 = vpop.permute.xlu0 %336
    %338 = vrot.lane.b32.xlu0 %v233, 112
    %v339 = vpop.permute.xlu0 %338
    %340 = vrot.lane.b32.xlu0 %v238, 112
    %v341 = vpop.permute.xlu0 %340
    %342 = vrot.lane.b32.xlu0 %v243, 112
    %v343 = vpop.permute.xlu0 %342
    %344 = vrot.lane.b32.xlu0 %v248, 112
    %v345 = vpop.permute.xlu0 %344
    %346 = vrot.lane.b32.xlu0 %v253, 112
    %v347 = vpop.permute.xlu0 %346
    %348 = vrot.lane.b32.xlu0 %v258, 112
    %v349 = vpop.permute.xlu0 %348
    %350 = vrot.lane.b32.xlu0 %v263, 112
    %v351 = vpop.permute.xlu0 %350
    %352 = vrot.lane.b32.xlu0 %v268, 112
    %v353 = vpop.permute.xlu0 %352
    %354 = vrot.lane.b32.xlu0 %v273, 112
    %v355 = vpop.permute.xlu0 %354
    %v372 = vmul.f32 %v279, %v325
    %v373 = vmul.f32 %v279, %v327
    %v374 = vmul.f32 %v283, %v329
    %v375 = vmul.f32 %v283, %v331
    %v376 = vmul.f32 %v287, %v333
    %v377 = vmul.f32 %v287, %v335
    %v378 = vmul.f32 %v291, %v337
    %v379 = vmul.f32 %v291, %v339
    %v380 = vmul.f32 %v295, %v341
    %v381 = vmul.f32 %v295, %v343
    %v382 = vmul.f32 %v299, %v345
    %v383 = vmul.f32 %v299, %v347
    %v384 = vmul.f32 %v303, %v349
    %v385 = vmul.f32 %v303, %v351
    %v386 = vmul.f32 %v307, %v353
    %v387 = vmul.f32 %v307, %v355
    %v388 = vld [vmem:[%s3] sm:$0xff]
    %v389 = vld [vmem:[%s3 + $0x8] sm:$0xff]
    %vm390 = vcmask 130048
    %v392 = vsel %vm390, %v372, 0
    %v395 = vsel %vm390, %v373, 0
    %v398 = vsel %vm390, %v374, 0
    %v401 = vsel %vm390, %v375, 0
    %v404 = vsel %vm390, %v376, 0
    %v407 = vsel %vm390, %v377, 0
    %v410 = vsel %vm390, %v378, 0
    %v413 = vsel %vm390, %v379, 0
    %v416 = vsel %vm390, %v380, 0
    %v419 = vsel %vm390, %v381, 0
    %v422 = vsel %vm390, %v382, 0
    %v425 = vsel %vm390, %v383, 0
    %v428 = vsel %vm390, %v384, 0
    %v431 = vsel %vm390, %v385, 0
    %v434 = vsel %vm390, %v386, 0
    %v437 = vsel %vm390, %v387, 0
    %439 = vmatprep.subr.mxu0 0.0
    %440 = vmatpush1.msra.mxu0 %v388
    %441 = vmatprep.subr.mxu0 0.0
    %442 = vmatpush1.msra.mxu0 %v389
    %443 = vmatprep.subr.mxu0 0.0
    %444 = vmatpush1.msra.mxu0 0.0
    %445 = vmatprep.subr.mxu0 0.0
    %446 = vmatpush1.msra.mxu0 0.0
    %447 = vmatprep.subr.mxu0 0.0
    %448 = vmatpush1.msra.mxu0 0.0
    %449 = vmatprep.subr.mxu0 0.0
    %450 = vmatpush1.msra.mxu0 0.0
    %451 = vmatprep.subr.mxu0 0.0
    %452 = vmatpush1.msra.mxu0 0.0
    %453 = vmatprep.subr.mxu0 0.0
    %454 = vmatpush1.msra.mxu0 0.0
    %455 = vmatprep.subr.mxu0 0.0
    %456 = vmatpush1.msra.mxu0 0.0
    %457 = vmatprep.subr.mxu0 0.0
    %458 = vmatpush1.msra.mxu0 0.0
    %459 = vmatprep.subr.mxu0 0.0
    %460 = vmatpush1.msra.mxu0 0.0
    %461 = vmatprep.subr.mxu0 0.0
    %462 = vmatpush1.msra.mxu0 0.0
    %463 = vmatprep.subr.mxu0 0.0
    %464 = vmatpush1.msra.mxu0 0.0
    %465 = vmatprep.subr.mxu0 0.0
    %466 = vmatpush1.msra.mxu0 0.0
    %467 = vmatprep.subr.mxu0 0.0
    %468 = vmatpush1.msra.mxu0 0.0
    %469 = vmatprep.subr.mxu0 0.0
    %470 = vmatpush1.msra.mxu0 0.0
    %471 = vmatprep.subr.mxu0 0.0
    %472 = vmatpush1.msra.mxu0 0.0
    %473 = vmatprep.subr.mxu0 0.0
    %474 = vmatpush1.msra.mxu0 0.0
    %475 = vmatprep.subr.mxu0 0.0
    %476 = vmatpush1.msra.mxu0 0.0
    %477 = vmatprep.subr.mxu0 0.0
    %478 = vmatpush1.msra.mxu0 0.0
    %479 = vmatprep.subr.mxu0 0.0
    %480 = vmatpush1.msra.mxu0 0.0
    %481 = vmatprep.subr.mxu0 0.0
    %482 = vmatpush1.msra.mxu0 0.0
    %483 = vmatprep.subr.mxu0 0.0
    %484 = vmatpush1.msra.mxu0 0.0
    %485 = vmatprep.subr.mxu0 0.0
    %486 = vmatpush1.msra.mxu0 0.0
    %487 = vmatprep.subr.mxu0 0.0
    %488 = vmatpush1.msra.mxu0 0.0
    %489 = vmatprep.subr.mxu0 0.0
    %490 = vmatpush1.msra.mxu0 0.0
    %491 = vmatprep.subr.mxu0 0.0
    %492 = vmatpush1.msra.mxu0 0.0
    %493 = vmatprep.subr.mxu0 0.0
    %494 = vmatpush1.msra.mxu0 0.0
    %495 = vmatprep.subr.mxu0 0.0
    %496 = vmatpush1.msra.mxu0 0.0
    %497 = vmatprep.subr.mxu0 0.0
    %498 = vmatpush1.msra.mxu0 0.0
    %499 = vmatprep.subr.mxu0 0.0
    %500 = vmatpush1.msra.mxu0 0.0
    %501 = vmatprep.subr.mxu0 0.0
    %502 = vmatpush1.msra.mxu0 0.0
    %503 = vmatprep.mubr.f32.mxu0 0.0
    %504 = vmatmul.mubr.f32.gmra.mrb[0].mxu0 %v392
    %v505 = vpop.f32.mrb[0].mxu0
    %v506 = vadd.f32 0.0, %v505
    %v507 = vpop.f32.mrb[0].mxu0
    %508 = vmatprep.mubr.f32.mxu0 0.0
    %509 = vmatmul.mubr.f32.gmra.mrb[0].mxu0 %v395
    %v510 = vpop.f32.mrb[0].mxu0
    %v511 = vadd.f32 0.0, %v510
    %v512 = vpop.f32.mrb[0].mxu0
    %513 = vmatprep.mubr.f32.mxu0 0.0
    %514 = vmatmul.mubr.f32.gmra.mrb[0].mxu0 %v398
    %v515 = vpop.f32.mrb[0].mxu0
    %v516 = vadd.f32 0.0, %v515
    %v517 = vpop.f32.mrb[0].mxu0
    %518 = vmatprep.mubr.f32.mxu0 0.0
    %519 = vmatmul.mubr.f32.gmra.mrb[0].mxu0 %v401
    %v520 = vpop.f32.mrb[0].mxu0
    %v521 = vadd.f32 0.0, %v520
    %v522 = vpop.f32.mrb[0].mxu0
    %523 = vmatprep.mubr.f32.mxu0 0.0
    %524 = vmatmul.mubr.f32.gmra.mrb[0].mxu0 %v404
    %v525 = vpop.f32.mrb[0].mxu0
    %v526 = vadd.f32 0.0, %v525
    %v527 = vpop.f32.mrb[0].mxu0
    %528 = vmatprep.mubr.f32.mxu0 0.0
    %529 = vmatmul.mubr.f32.gmra.mrb[0].mxu0 %v407
    %v530 = vpop.f32.mrb[0].mxu0
    %v531 = vadd.f32 0.0, %v530
    %v532 = vpop.f32.mrb[0].mxu0
    %533 = vmatprep.mubr.f32.mxu0 0.0
    %534 = vmatmul.mubr.f32.gmra.mrb[0].mxu0 %v410
    %v535 = vpop.f32.mrb[0].mxu0
    %v536 = vadd.f32 0.0, %v535
    %v537 = vpop.f32.mrb[0].mxu0
    %538 = vmatprep.mubr.f32.mxu0 0.0
    %539 = vmatmul.mubr.f32.gmra.mrb[0].mxu0 %v413
    %v540 = vpop.f32.mrb[0].mxu0
    %v541 = vadd.f32 0.0, %v540
    %v542 = vpop.f32.mrb[0].mxu0
    %543 = vmatprep.mubr.f32.mxu0 0.0
    %544 = vmatmul.mubr.f32.gmra.mrb[0].mxu0 %v416
    %v545 = vpop.f32.mrb[0].mxu0
    %v546 = vadd.f32 0.0, %v545
    %v547 = vpop.f32.mrb[0].mxu0
    %548 = vmatprep.mubr.f32.mxu0 0.0
    %549 = vmatmul.mubr.f32.gmra.mrb[0].mxu0 %v419
    %v550 = vpop.f32.mrb[0].mxu0
    %v551 = vadd.f32 0.0, %v550
    %v552 = vpop.f32.mrb[0].mxu0
    %553 = vmatprep.mubr.f32.mxu0 0.0
    %554 = vmatmul.mubr.f32.gmra.mrb[0].mxu0 %v422
    %v555 = vpop.f32.mrb[0].mxu0
    %v556 = vadd.f32 0.0, %v555
    %v557 = vpop.f32.mrb[0].mxu0
    %558 = vmatprep.mubr.f32.mxu0 0.0
    %559 = vmatmul.mubr.f32.gmra.mrb[0].mxu0 %v425
    %v560 = vpop.f32.mrb[0].mxu0
    %v561 = vadd.f32 0.0, %v560
    %v562 = vpop.f32.mrb[0].mxu0
    %563 = vmatprep.mubr.f32.mxu0 0.0
    %564 = vmatmul.mubr.f32.gmra.mrb[0].mxu0 %v428
    %v565 = vpop.f32.mrb[0].mxu0
    %v566 = vadd.f32 0.0, %v565
    %v567 = vpop.f32.mrb[0].mxu0
    %568 = vmatprep.mubr.f32.mxu0 0.0
    %569 = vmatmul.mubr.f32.gmra.mrb[0].mxu0 %v431
    %v570 = vpop.f32.mrb[0].mxu0
    %v571 = vadd.f32 0.0, %v570
    %v572 = vpop.f32.mrb[0].mxu0
    %573 = vmatprep.mubr.f32.mxu0 0.0
    %574 = vmatmul.mubr.f32.gmra.mrb[0].mxu0 %v434
    %v575 = vpop.f32.mrb[0].mxu0
    %v576 = vadd.f32 0.0, %v575
    %v577 = vpop.f32.mrb[0].mxu0
    %578 = vmatprep.mubr.f32.mxu0 0.0
    %579 = vmatmul.mubr.f32.gmra.mrb[0].mxu0 %v437
    %v580 = vpop.f32.mrb[0].mxu0
    %v581 = vadd.f32 0.0, %v580
    %v582 = vpop.f32.mrb[0].mxu0
    %583 = vdwg.mxu0
    %vm584 = vcmask 31744
    %v585 = vsel %vm584, %v506, -inf
    %v586 = vsel %vm584, %v511, -inf
    %v587 = vmax.f32 %v585, %v586
    %v588 = vrot.slane %v587, 4
    %v589 = vmax.f32 %v587, %v588
    %v590 = vrot.slane %v589, 2
    %v591 = vmax.f32 %v589, %v590
    %v592 = vrot.slane %v591, 1
    %v593 = vmax.f32 %v591, %v592
    %v594 = vsel %vm584, %v516, -inf
    %v595 = vsel %vm584, %v521, -inf
    %v596 = vmax.f32 %v594, %v595
    %v597 = vrot.slane %v596, 4
    %v598 = vmax.f32 %v596, %v597
    %v599 = vrot.slane %v598, 2
    %v600 = vmax.f32 %v598, %v599
    %v601 = vrot.slane %v600, 1
    %v602 = vmax.f32 %v600, %v601
    %v603 = vsel %vm584, %v526, -inf
    %v604 = vsel %vm584, %v531, -inf
    %v605 = vmax.f32 %v603, %v604
    %v606 = vrot.slane %v605, 4
    %v607 = vmax.f32 %v605, %v606
    %v608 = vrot.slane %v607, 2
    %v609 = vmax.f32 %v607, %v608
    %v610 = vrot.slane %v609, 1
    %v611 = vmax.f32 %v609, %v610
    %v612 = vsel %vm584, %v536, -inf
    %v613 = vsel %vm584, %v541, -inf
    %v614 = vmax.f32 %v612, %v613
    %v615 = vrot.slane %v614, 4
    %v616 = vmax.f32 %v614, %v615
    %v617 = vrot.slane %v616, 2
    %v618 = vmax.f32 %v616, %v617
    %v619 = vrot.slane %v618, 1
    %v620 = vmax.f32 %v618, %v619
    %v621 = vsel %vm584, %v546, -inf
    %v622 = vsel %vm584, %v551, -inf
    %v623 = vmax.f32 %v621, %v622
    %v624 = vrot.slane %v623, 4
    %v625 = vmax.f32 %v623, %v624
    %v626 = vrot.slane %v625, 2
    %v627 = vmax.f32 %v625, %v626
    %v628 = vrot.slane %v627, 1
    %v629 = vmax.f32 %v627, %v628
    %v630 = vsel %vm584, %v556, -inf
    %v631 = vsel %vm584, %v561, -inf
    %v632 = vmax.f32 %v630, %v631
    %v633 = vrot.slane %v632, 4
    %v634 = vmax.f32 %v632, %v633
    %v635 = vrot.slane %v634, 2
    %v636 = vmax.f32 %v634, %v635
    %v637 = vrot.slane %v636, 1
    %v638 = vmax.f32 %v636, %v637
    %v639 = vsel %vm584, %v566, -inf
    %v640 = vsel %vm584, %v571, -inf
    %v641 = vmax.f32 %v639, %v640
    %v642 = vrot.slane %v641, 4
    %v643 = vmax.f32 %v641, %v642
    %v644 = vrot.slane %v643, 2
    %v645 = vmax.f32 %v643, %v644
    %v646 = vrot.slane %v645, 1
    %v647 = vmax.f32 %v645, %v646
    %v648 = vsel %vm584, %v576, -inf
    %v649 = vsel %vm584, %v581, -inf
    %v650 = vmax.f32 %v648, %v649
    %v651 = vrot.slane %v650, 4
    %v652 = vmax.f32 %v650, %v651
    %v653 = vrot.slane %v652, 2
    %v654 = vmax.f32 %v652, %v653
    %v655 = vrot.slane %v654, 1
    %v656 = vmax.f32 %v654, %v655
    %v657 = vsub.f32 %v506, %v593
    %v658 = vsub.f32 %v511, %v593
    %v659 = vsub.f32 %v516, %v602
    %v660 = vsub.f32 %v521, %v602
    %v661 = vsub.f32 %v526, %v611
    %v662 = vsub.f32 %v531, %v611
    %v663 = vsub.f32 %v536, %v620
    %v664 = vsub.f32 %v541, %v620
    %v665 = vsub.f32 %v546, %v629
    %v666 = vsub.f32 %v551, %v629
    %v667 = vsub.f32 %v556, %v638
    %v668 = vsub.f32 %v561, %v638
    %v669 = vsub.f32 %v566, %v647
    %v670 = vsub.f32 %v571, %v647
    %v671 = vsub.f32 %v576, %v656
    %v672 = vsub.f32 %v581, %v656
    %v673 = vmul.f32 %v657, 1.442695
    %v674 = vpow.pop %v673
    %v675 = vmul.f32 %v658, 1.442695
    %v676 = vpow.pop %v675
    %v677 = vmul.f32 %v659, 1.442695
    %v678 = vpow.pop %v677
    %v679 = vmul.f32 %v660, 1.442695
    %v680 = vpow.pop %v679
    %v681 = vmul.f32 %v661, 1.442695
    %v682 = vpow.pop %v681
    %v683 = vmul.f32 %v662, 1.442695
    %v684 = vpow.pop %v683
    %v685 = vmul.f32 %v663, 1.442695
    %v686 = vpow.pop %v685
    %v687 = vmul.f32 %v664, 1.442695
    %v688 = vpow.pop %v687
    %v689 = vmul.f32 %v665, 1.442695
    %v690 = vpow.pop %v689
    %v691 = vmul.f32 %v666, 1.442695
    %v692 = vpow.pop %v691
    %v693 = vmul.f32 %v667, 1.442695
    %v694 = vpow.pop %v693
    %v695 = vmul.f32 %v668, 1.442695
    %v696 = vpow.pop %v695
    %v697 = vmul.f32 %v669, 1.442695
    %v698 = vpow.pop %v697
    %v699 = vmul.f32 %v670, 1.442695
    %v700 = vpow.pop %v699
    %v701 = vmul.f32 %v671, 1.442695
    %v702 = vpow.pop %v701
    %v703 = vmul.f32 %v672, 1.442695
    %v704 = vpow.pop %v703
    %v705 = vsel %vm584, %v674, 0.0
    %v706 = vsel %vm584, %v676, 0.0
    %v707 = vadd.f32 %v705, %v706
    %v708 = vrot.slane %v707, 4
    %v709 = vadd.f32 %v707, %v708
    %v710 = vrot.slane %v709, 2
    %v711 = vadd.f32 %v709, %v710
    %v712 = vrot.slane %v711, 1
    %v713 = vadd.f32 %v711, %v712
    %v714 = vsel %vm584, %v678, 0.0
    %v715 = vsel %vm584, %v680, 0.0
    %v716 = vadd.f32 %v714, %v715
    %v717 = vrot.slane %v716, 4
    %v718 = vadd.f32 %v716, %v717
    %v719 = vrot.slane %v718, 2
    %v720 = vadd.f32 %v718, %v719
    %v721 = vrot.slane %v720, 1
    %v722 = vadd.f32 %v720, %v721
    %v723 = vsel %vm584, %v682, 0.0
    %v724 = vsel %vm584, %v684, 0.0
    %v725 = vadd.f32 %v723, %v724
    %v726 = vrot.slane %v725, 4
    %v727 = vadd.f32 %v725, %v726
    %v728 = vrot.slane %v727, 2
    %v729 = vadd.f32 %v727, %v728
    %v730 = vrot.slane %v729, 1
    %v731 = vadd.f32 %v729, %v730
    %v732 = vsel %vm584, %v686, 0.0
    %v733 = vsel %vm584, %v688, 0.0
    %v734 = vadd.f32 %v732, %v733
    %v735 = vrot.slane %v734, 4
    %v736 = vadd.f32 %v734, %v735
    %v737 = vrot.slane %v736, 2
    %v738 = vadd.f32 %v736, %v737
    %v739 = vrot.slane %v738, 1
    %v740 = vadd.f32 %v738, %v739
    %v741 = vsel %vm584, %v690, 0.0
    %v742 = vsel %vm584, %v692, 0.0
    %v743 = vadd.f32 %v741, %v742
    %v744 = vrot.slane %v743, 4
    %v745 = vadd.f32 %v743, %v744
    %v746 = vrot.slane %v745, 2
    %v747 = vadd.f32 %v745, %v746
    %v748 = vrot.slane %v747, 1
    %v749 = vadd.f32 %v747, %v748
    %v750 = vsel %vm584, %v694, 0.0
    %v751 = vsel %vm584, %v696, 0.0
    %v752 = vadd.f32 %v750, %v751
    %v753 = vrot.slane %v752, 4
    %v754 = vadd.f32 %v752, %v753
    %v755 = vrot.slane %v754, 2
    %v756 = vadd.f32 %v754, %v755
    %v757 = vrot.slane %v756, 1
    %v758 = vadd.f32 %v756, %v757
    %v759 = vsel %vm584, %v698, 0.0
    %v760 = vsel %vm584, %v700, 0.0
    %v761 = vadd.f32 %v759, %v760
    %v762 = vrot.slane %v761, 4
    %v763 = vadd.f32 %v761, %v762
    %v764 = vrot.slane %v763, 2
    %v765 = vadd.f32 %v763, %v764
    %v766 = vrot.slane %v765, 1
    %v767 = vadd.f32 %v765, %v766
    %v768 = vsel %vm584, %v702, 0.0
    %v769 = vsel %vm584, %v704, 0.0
    %v770 = vadd.f32 %v768, %v769
    %v771 = vrot.slane %v770, 4
    %v772 = vadd.f32 %v770, %v771
    %v773 = vrot.slane %v772, 2
    %v774 = vadd.f32 %v772, %v773
    %v775 = vrot.slane %v774, 1
    %v776 = vadd.f32 %v774, %v775
    %v777 = vrcp.pop %v713
    %v778 = vrcp.pop %v722
    %v779 = vrcp.pop %v731
    %v780 = vrcp.pop %v740
    %v781 = vrcp.pop %v749
    %v782 = vrcp.pop %v758
    %v783 = vrcp.pop %v767
    %v784 = vrcp.pop %v776
    %v785 = vmul.f32 %v674, %v777
    %v786 = vmul.f32 %v676, %v777
    %v787 = vmul.f32 %v678, %v778
    %v788 = vmul.f32 %v680, %v778
    %v789 = vmul.f32 %v682, %v779
    %v790 = vmul.f32 %v684, %v779
    %v791 = vmul.f32 %v686, %v780
    %v792 = vmul.f32 %v688, %v780
    %v793 = vmul.f32 %v690, %v781
    %v794 = vmul.f32 %v692, %v781
    %v795 = vmul.f32 %v694, %v782
    %v796 = vmul.f32 %v696, %v782
    %v797 = vmul.f32 %v698, %v783
    %v798 = vmul.f32 %v700, %v783
    %v799 = vmul.f32 %v702, %v784
    %v800 = vmul.f32 %v704, %v784
    %v801 = vld [vmem:[%s4] sm:$0xf]
    %v803 = vsel %vm584, %v785, 0
    %v806 = vsel %vm584, %v786, 0
    %v809 = vsel %vm584, %v787, 0
    %v812 = vsel %vm584, %v788, 0
    %v815 = vsel %vm584, %v789, 0
    %v818 = vsel %vm584, %v790, 0
    %v821 = vsel %vm584, %v791, 0
    %v824 = vsel %vm584, %v792, 0
    %v827 = vsel %vm584, %v793, 0
    %v830 = vsel %vm584, %v794, 0
    %v833 = vsel %vm584, %v795, 0
    %v836 = vsel %vm584, %v796, 0
    %v839 = vsel %vm584, %v797, 0
    %v842 = vsel %vm584, %v798, 0
    %v845 = vsel %vm584, %v799, 0
    %v848 = vsel %vm584, %v800, 0
    %vm850 = vcmask 1043456
    %v852 = vsel %vm850, %v801, 0
    %854 = vmatprep.subr.mxu0 0.0
    %855 = vmatpush1.msra.mxu0 %v852
    %856 = vmatprep.subr.mxu0 0.0
    %857 = vmatpush1.msra.mxu0 0.0
    %858 = vmatprep.subr.mxu0 0.0
    %859 = vmatpush1.msra.mxu0 0.0
    %860 = vmatprep.subr.mxu0 0.0
    %861 = vmatpush1.msra.mxu0 0.0
    %862 = vmatprep.subr.mxu0 0.0
    %863 = vmatpush1.msra.mxu0 0.0
    %864 = vmatprep.subr.mxu0 0.0
    %865 = vmatpush1.msra.mxu0 0.0
    %866 = vmatprep.subr.mxu0 0.0
    %867 = vmatpush1.msra.mxu0 0.0
    %868 = vmatprep.subr.mxu0 0.0
    %869 = vmatpush1.msra.mxu0 0.0
    %870 = vmatprep.subr.mxu0 0.0
    %871 = vmatpush1.msra.mxu0 0.0
    %872 = vmatprep.subr.mxu0 0.0
    %873 = vmatpush1.msra.mxu0 0.0
    %874 = vmatprep.subr.mxu0 0.0
    %875 = vmatpush1.msra.mxu0 0.0
    %876 = vmatprep.subr.mxu0 0.0
    %877 = vmatpush1.msra.mxu0 0.0
    %878 = vmatprep.subr.mxu0 0.0
    %879 = vmatpush1.msra.mxu0 0.0
    %880 = vmatprep.subr.mxu0 0.0
    %881 = vmatpush1.msra.mxu0 0.0
    %882 = vmatprep.subr.mxu0 0.0
    %883 = vmatpush1.msra.mxu0 0.0
    %884 = vmatprep.subr.mxu0 0.0
    %885 = vmatpush1.msra.mxu0 0.0
    %886 = vmatprep.subr.mxu0 0.0
    %887 = vmatpush1.msra.mxu0 0.0
    %888 = vmatprep.subr.mxu0 0.0
    %889 = vmatpush1.msra.mxu0 0.0
    %890 = vmatprep.subr.mxu0 0.0
    %891 = vmatpush1.msra.mxu0 0.0
    %892 = vmatprep.subr.mxu0 0.0
    %893 = vmatpush1.msra.mxu0 0.0
    %894 = vmatprep.subr.mxu0 0.0
    %895 = vmatpush1.msra.mxu0 0.0
    %896 = vmatprep.subr.mxu0 0.0
    %897 = vmatpush1.msra.mxu0 0.0
    %898 = vmatprep.subr.mxu0 0.0
    %899 = vmatpush1.msra.mxu0 0.0
    %900 = vmatprep.subr.mxu0 0.0
    %901 = vmatpush1.msra.mxu0 0.0
    %902 = vmatprep.subr.mxu0 0.0
    %903 = vmatpush1.msra.mxu0 0.0
    %904 = vmatprep.subr.mxu0 0.0
    %905 = vmatpush1.msra.mxu0 0.0
    %906 = vmatprep.subr.mxu0 0.0
    %907 = vmatpush1.msra.mxu0 0.0
    %908 = vmatprep.subr.mxu0 0.0
    %909 = vmatpush1.msra.mxu0 0.0
    %910 = vmatprep.subr.mxu0 0.0
    %911 = vmatpush1.msra.mxu0 0.0
    %912 = vmatprep.subr.mxu0 0.0
    %913 = vmatpush1.msra.mxu0 0.0
    %914 = vmatprep.subr.mxu0 0.0
    %915 = vmatpush1.msra.mxu0 0.0
    %916 = vmatprep.subr.mxu0 0.0
    %917 = vmatpush1.msra.mxu0 0.0
    %918 = vmatprep.mubr.f32.mxu0 0.0
    %919 = vmatmul.mubr.f32.gmra.mrb[0].mxu0 %v803
    %v920 = vpop.f32.mrb[0].mxu0
    %v921 = vadd.f32 0.0, %v920
    %v922 = vpop.f32.mrb[0].mxu0
    %923 = vmatprep.mubr.f32.mxu0 0.0
    %924 = vmatmul.mubr.f32.gmra.mrb[0].mxu0 %v806
    %v925 = vpop.f32.mrb[0].mxu0
    %v926 = vadd.f32 0.0, %v925
    %v927 = vpop.f32.mrb[0].mxu0
    %928 = vmatprep.mubr.f32.mxu0 0.0
    %929 = vmatmul.mubr.f32.gmra.mrb[0].mxu0 %v809
    %v930 = vpop.f32.mrb[0].mxu0
    %v931 = vadd.f32 0.0, %v930
    %v932 = vpop.f32.mrb[0].mxu0
    %933 = vmatprep.mubr.f32.mxu0 0.0
    %934 = vmatmul.mubr.f32.gmra.mrb[0].mxu0 %v812
    %v935 = vpop.f32.mrb[0].mxu0
    %v936 = vadd.f32 0.0, %v935
    %v937 = vpop.f32.mrb[0].mxu0
    %938 = vmatprep.mubr.f32.mxu0 0.0
    %939 = vmatmul.mubr.f32.gmra.mrb[0].mxu0 %v815
    %v940 = vpop.f32.mrb[0].mxu0
    %v941 = vadd.f32 0.0, %v940
    %v942 = vpop.f32.mrb[0].mxu0
    %943 = vmatprep.mubr.f32.mxu0 0.0
    %944 = vmatmul.mubr.f32.gmra.mrb[0].mxu0 %v818
    %v945 = vpop.f32.mrb[0].mxu0
    %v946 = vadd.f32 0.0, %v945
    %v947 = vpop.f32.mrb[0].mxu0
    %948 = vmatprep.mubr.f32.mxu0 0.0
    %949 = vmatmul.mubr.f32.gmra.mrb[0].mxu0 %v821
    %v950 = vpop.f32.mrb[0].mxu0
    %v951 = vadd.f32 0.0, %v950
    %v952 = vpop.f32.mrb[0].mxu0
    %953 = vmatprep.mubr.f32.mxu0 0.0
    %954 = vmatmul.mubr.f32.gmra.mrb[0].mxu0 %v824
    %v955 = vpop.f32.mrb[0].mxu0
    %v956 = vadd.f32 0.0, %v955
    %v957 = vpop.f32.mrb[0].mxu0
    %958 = vmatprep.mubr.f32.mxu0 0.0
    %959 = vmatmul.mubr.f32.gmra.mrb[0].mxu0 %v827
    %v960 = vpop.f32.mrb[0].mxu0
    %v961 = vadd.f32 0.0, %v960
    %v962 = vpop.f32.mrb[0].mxu0
    %963 = vmatprep.mubr.f32.mxu0 0.0
    %964 = vmatmul.mubr.f32.gmra.mrb[0].mxu0 %v830
    %v965 = vpop.f32.mrb[0].mxu0
    %v966 = vadd.f32 0.0, %v965
    %v967 = vpop.f32.mrb[0].mxu0
    %968 = vmatprep.mubr.f32.mxu0 0.0
    %969 = vmatmul.mubr.f32.gmra.mrb[0].mxu0 %v833
    %v970 = vpop.f32.mrb[0].mxu0
    %v971 = vadd.f32 0.0, %v970
    %v972 = vpop.f32.mrb[0].mxu0
    %973 = vmatprep.mubr.f32.mxu0 0.0
    %974 = vmatmul.mubr.f32.gmra.mrb[0].mxu0 %v836
    %v975 = vpop.f32.mrb[0].mxu0
    %v976 = vadd.f32 0.0, %v975
    %v977 = vpop.f32.mrb[0].mxu0
    %978 = vmatprep.mubr.f32.mxu0 0.0
    %979 = vmatmul.mubr.f32.gmra.mrb[0].mxu0 %v839
    %v980 = vpop.f32.mrb[0].mxu0
    %v981 = vadd.f32 0.0, %v980
    %v982 = vpop.f32.mrb[0].mxu0
    %983 = vmatprep.mubr.f32.mxu0 0.0
    %984 = vmatmul.mubr.f32.gmra.mrb[0].mxu0 %v842
    %v985 = vpop.f32.mrb[0].mxu0
    %v986 = vadd.f32 0.0, %v985
    %v987 = vpop.f32.mrb[0].mxu0
    %988 = vmatprep.mubr.f32.mxu0 0.0
    %989 = vmatmul.mubr.f32.gmra.mrb[0].mxu0 %v845
    %v990 = vpop.f32.mrb[0].mxu0
    %v991 = vadd.f32 0.0, %v990
    %v992 = vpop.f32.mrb[0].mxu0
    %993 = vmatprep.mubr.f32.mxu0 0.0
    %994 = vmatmul.mubr.f32.gmra.mrb[0].mxu0 %v848
    %v995 = vpop.f32.mrb[0].mxu0
    %v996 = vadd.f32 0.0, %v995
    %v997 = vpop.f32.mrb[0].mxu0
    %998 = vdwg.mxu0
    %999 = vrot.lane.b32.xlu0 %v198, 96
    %v1000 = vpop.permute.xlu0 %999
    %1001 = vrot.lane.b32.xlu0 %v203, 96
    %v1002 = vpop.permute.xlu0 %1001
    %1003 = vrot.lane.b32.xlu0 %v208, 96
    %v1004 = vpop.permute.xlu0 %1003
    %1005 = vrot.lane.b32.xlu0 %v213, 96
    %v1006 = vpop.permute.xlu0 %1005
    %1007 = vrot.lane.b32.xlu0 %v218, 96
    %v1008 = vpop.permute.xlu0 %1007
    %1009 = vrot.lane.b32.xlu0 %v223, 96
    %v1010 = vpop.permute.xlu0 %1009
    %1011 = vrot.lane.b32.xlu0 %v228, 96
    %v1012 = vpop.permute.xlu0 %1011
    %1013 = vrot.lane.b32.xlu0 %v233, 96
    %v1014 = vpop.permute.xlu0 %1013
    %1015 = vrot.lane.b32.xlu0 %v238, 96
    %v1016 = vpop.permute.xlu0 %1015
    %1017 = vrot.lane.b32.xlu0 %v243, 96
    %v1018 = vpop.permute.xlu0 %1017
    %1019 = vrot.lane.b32.xlu0 %v248, 96
    %v1020 = vpop.permute.xlu0 %1019
    %1021 = vrot.lane.b32.xlu0 %v253, 96
    %v1022 = vpop.permute.xlu0 %1021
    %1023 = vrot.lane.b32.xlu0 %v258, 96
    %v1024 = vpop.permute.xlu0 %1023
    %1025 = vrot.lane.b32.xlu0 %v263, 96
    %v1026 = vpop.permute.xlu0 %1025
    %1027 = vrot.lane.b32.xlu0 %v268, 96
    %v1028 = vpop.permute.xlu0 %1027
    %1029 = vrot.lane.b32.xlu0 %v273, 96
    %v1030 = vpop.permute.xlu0 %1029
    %v1047 = vmul.f32 %v921, %v1000
    %v1048 = vmul.f32 %v926, %v1002
    %v1049 = vmul.f32 %v931, %v1004
    %v1050 = vmul.f32 %v936, %v1006
    %v1051 = vmul.f32 %v941, %v1008
    %v1052 = vmul.f32 %v946, %v1010
    %v1053 = vmul.f32 %v951, %v1012
    %v1054 = vmul.f32 %v956, %v1014
    %v1055 = vmul.f32 %v961, %v1016
    %v1056 = vmul.f32 %v966, %v1018
    %v1057 = vmul.f32 %v971, %v1020
    %v1058 = vmul.f32 %v976, %v1022
    %v1059 = vmul.f32 %v981, %v1024
    %v1060 = vmul.f32 %v986, %v1026
    %v1061 = vmul.f32 %v991, %v1028
    %v1062 = vmul.f32 %v996, %v1030
    %v1063 = vsel %vm390, %v1047, 0.0
    %v1064 = vsel %vm390, %v1048, 0.0
    %v1065 = vadd.f32 %v1063, %v1064
    %v1066 = vrot.slane %v1065, 4
    %v1067 = vadd.f32 %v1065, %v1066
    %v1068 = vrot.slane %v1067, 2
    %v1069 = vadd.f32 %v1067, %v1068
    %v1070 = vrot.slane %v1069, 1
    %v1071 = vadd.f32 %v1069, %v1070
    %v1072 = vsel %vm390, %v1049, 0.0
    %v1073 = vsel %vm390, %v1050, 0.0
    %v1074 = vadd.f32 %v1072, %v1073
    %v1075 = vrot.slane %v1074, 4
    %v1076 = vadd.f32 %v1074, %v1075
    %v1077 = vrot.slane %v1076, 2
    %v1078 = vadd.f32 %v1076, %v1077
    %v1079 = vrot.slane %v1078, 1
    %v1080 = vadd.f32 %v1078, %v1079
    %v1081 = vsel %vm390, %v1051, 0.0
    %v1082 = vsel %vm390, %v1052, 0.0
    %v1083 = vadd.f32 %v1081, %v1082
    %v1084 = vrot.slane %v1083, 4
    %v1085 = vadd.f32 %v1083, %v1084
    %v1086 = vrot.slane %v1085, 2
    %v1087 = vadd.f32 %v1085, %v1086
    %v1088 = vrot.slane %v1087, 1
    %v1089 = vadd.f32 %v1087, %v1088
    %v1090 = vsel %vm390, %v1053, 0.0
    %v1091 = vsel %vm390, %v1054, 0.0
    %v1092 = vadd.f32 %v1090, %v1091
    %v1093 = vrot.slane %v1092, 4
    %v1094 = vadd.f32 %v1092, %v1093
    %v1095 = vrot.slane %v1094, 2
    %v1096 = vadd.f32 %v1094, %v1095
    %v1097 = vrot.slane %v1096, 1
    %v1098 = vadd.f32 %v1096, %v1097
    %v1099 = vsel %vm390, %v1055, 0.0
    %v1100 = vsel %vm390, %v1056, 0.0
    %v1101 = vadd.f32 %v1099, %v1100
    %v1102 = vrot.slane %v1101, 4
    %v1103 = vadd.f32 %v1101, %v1102
    %v1104 = vrot.slane %v1103, 2
    %v1105 = vadd.f32 %v1103, %v1104
    %v1106 = vrot.slane %v1105, 1
    %v1107 = vadd.f32 %v1105, %v1106
    %v1108 = vsel %vm390, %v1057, 0.0
    %v1109 = vsel %vm390, %v1058, 0.0
    %v1110 = vadd.f32 %v1108, %v1109
    %v1111 = vrot.slane %v1110, 4
    %v1112 = vadd.f32 %v1110, %v1111
    %v1113 = vrot.slane %v1112, 2
    %v1114 = vadd.f32 %v1112, %v1113
    %v1115 = vrot.slane %v1114, 1
    %v1116 = vadd.f32 %v1114, %v1115
    %v1117 = vsel %vm390, %v1059, 0.0
    %v1118 = vsel %vm390, %v1060, 0.0
    %v1119 = vadd.f32 %v1117, %v1118
    %v1120 = vrot.slane %v1119, 4
    %v1121 = vadd.f32 %v1119, %v1120
    %v1122 = vrot.slane %v1121, 2
    %v1123 = vadd.f32 %v1121, %v1122
    %v1124 = vrot.slane %v1123, 1
    %v1125 = vadd.f32 %v1123, %v1124
    %v1126 = vsel %vm390, %v1061, 0.0
    %v1127 = vsel %vm390, %v1062, 0.0
    %v1128 = vadd.f32 %v1126, %v1127
    %v1129 = vrot.slane %v1128, 4
    %v1130 = vadd.f32 %v1128, %v1129
    %v1131 = vrot.slane %v1130, 2
    %v1132 = vadd.f32 %v1130, %v1131
    %v1133 = vrot.slane %v1132, 1
    %v1134 = vadd.f32 %v1132, %v1133
    %v1135 = vld [vmem:[%s5] sm:$0xff]
    %v1136 = vld [vmem:[%s5 + $0x8] sm:$0xff]
    %v1137 = vld [vmem:[%s6] sm:$0x1]
    %v1139 = vlaneseq
    %v1140 = vshrl.u32 %v1139, 7
    %v1141 = vsub.s32 0, %v1140
    %v1142 = vrot.slane %v1137, %v1141
    %vm1152 = vcmask 1041409
    %v1153 = vsel %vm1152, %v1080, %v1071
    %vm1154 = vcmask 1042434
    %v1155 = vsel %vm1154, %v1089, %v1153
    %vm1156 = vcmask 1043459
    %v1157 = vsel %vm1156, %v1098, %v1155
    %vm1158 = vcmask 1044484
    %v1159 = vsel %vm1158, %v1107, %v1157
    %vm1160 = vcmask 1045509
    %v1161 = vsel %vm1160, %v1116, %v1159
    %vm1162 = vcmask 1046534
    %v1163 = vsel %vm1162, %v1125, %v1161
    %vm1164 = vcmask 1047559
    %v1165 = vsel %vm1164, %v1134, %v1163
    %v1166 = vsel %vm390, %v1165, 0
    %1168 = vmatprep.subr.mxu0 0.0
    %1169 = vmatpush1.msra.mxu0 %v1135
    %1170 = vmatprep.subr.mxu0 0.0
    %1171 = vmatpush1.msra.mxu0 %v1136
    %1172 = vmatprep.subr.mxu0 0.0
    %1173 = vmatpush1.msra.mxu0 0.0
    %1174 = vmatprep.subr.mxu0 0.0
    %1175 = vmatpush1.msra.mxu0 0.0
    %1176 = vmatprep.subr.mxu0 0.0
    %1177 = vmatpush1.msra.mxu0 0.0
    %1178 = vmatprep.subr.mxu0 0.0
    %1179 = vmatpush1.msra.mxu0 0.0
    %1180 = vmatprep.subr.mxu0 0.0
    %1181 = vmatpush1.msra.mxu0 0.0
    %1182 = vmatprep.subr.mxu0 0.0
    %1183 = vmatpush1.msra.mxu0 0.0
    %1184 = vmatprep.subr.mxu0 0.0
    %1185 = vmatpush1.msra.mxu0 0.0
    %1186 = vmatprep.subr.mxu0 0.0
    %1187 = vmatpush1.msra.mxu0 0.0
    %1188 = vmatprep.subr.mxu0 0.0
    %1189 = vmatpush1.msra.mxu0 0.0
    %1190 = vmatprep.subr.mxu0 0.0
    %1191 = vmatpush1.msra.mxu0 0.0
    %1192 = vmatprep.subr.mxu0 0.0
    %1193 = vmatpush1.msra.mxu0 0.0
    %1194 = vmatprep.subr.mxu0 0.0
    %1195 = vmatpush1.msra.mxu0 0.0
    %1196 = vmatprep.subr.mxu0 0.0
    %1197 = vmatpush1.msra.mxu0 0.0
    %1198 = vmatprep.subr.mxu0 0.0
    %1199 = vmatpush1.msra.mxu0 0.0
    %1200 = vmatprep.subr.mxu0 0.0
    %1201 = vmatpush1.msra.mxu0 0.0
    %1202 = vmatprep.subr.mxu0 0.0
    %1203 = vmatpush1.msra.mxu0 0.0
    %1204 = vmatprep.subr.mxu0 0.0
    %1205 = vmatpush1.msra.mxu0 0.0
    %1206 = vmatprep.subr.mxu0 0.0
    %1207 = vmatpush1.msra.mxu0 0.0
    %1208 = vmatprep.subr.mxu0 0.0
    %1209 = vmatpush1.msra.mxu0 0.0
    %1210 = vmatprep.subr.mxu0 0.0
    %1211 = vmatpush1.msra.mxu0 0.0
    %1212 = vmatprep.subr.mxu0 0.0
    %1213 = vmatpush1.msra.mxu0 0.0
    %1214 = vmatprep.subr.mxu0 0.0
    %1215 = vmatpush1.msra.mxu0 0.0
    %1216 = vmatprep.subr.mxu0 0.0
    %1217 = vmatpush1.msra.mxu0 0.0
    %1218 = vmatprep.subr.mxu0 0.0
    %1219 = vmatpush1.msra.mxu0 0.0
    %1220 = vmatprep.subr.mxu0 0.0
    %1221 = vmatpush1.msra.mxu0 0.0
    %1222 = vmatprep.subr.mxu0 0.0
    %1223 = vmatpush1.msra.mxu0 0.0
    %1224 = vmatprep.subr.mxu0 0.0
    %1225 = vmatpush1.msra.mxu0 0.0
    %1226 = vmatprep.subr.mxu0 0.0
    %1227 = vmatpush1.msra.mxu0 0.0
    %1228 = vmatprep.subr.mxu0 0.0
    %1229 = vmatpush1.msra.mxu0 0.0
    %1230 = vmatprep.subr.mxu0 0.0
    %1231 = vmatpush1.msra.mxu0 0.0
    %1232 = vmatprep.mubr.f32.mxu0 0.0
    %1233 = vmatmul.mubr.f32.gmra.mrb[0].mxu0 %v1166
    %v1234 = vpop.f32.mrb[0].mxu0
    %v1235 = vadd.f32 %v1142, %v1234
    %v1236 = vpop.f32.mrb[0].mxu0
    %1237 = vdwg.mxu0
    %1238 = vst.msk [vmem:[#allocation7] sm:$0xff] %vm82, %v1235
    // Predicated region
    $region38: #{cross_attention_forward.1} parent=1 // pred_check
      _
    $region39: #{cross_attention_forward.1} parent=1 // pred_check_branch
      %1240 = sbr.rel (0) target = $region41
    $region40: #{cross_attention_forward.1} parent=1 // pred_region
      %s1242 = ssub.s32 128, 128
      %1243 = vsyncadd [#allocation4], %s1242
      %s1245 = sshll.u32 [#allocation7], 4
      %s1246 = int_to_ptr.vmem [resolvable:$true] %s1245
      %1248 = dma.vmem_to_hbm [thread:$0]  %s1246, 128, %s7, [#allocation4]
    $region41: #{cross_attention_forward.1} parent=1 // pred_fallthru
      _
    // Predicated region
    $region42: #{cross_attention_forward.1} parent=1 // pred_check
      _
    $region43: #{cross_attention_forward.1} parent=1 // pred_check_branch
      %1250 = sbr.rel (0) target = $region45
    $region44: #{cross_attention_forward.1} parent=1 // pred_region
      %1251 = dma.done [#allocation4], 128
    $region45: #{cross_attention_forward.1} parent=1 // pred_fallthru
      _
    %1252 = vsyncpa [#allocation3], 1
    %1253 = vsyncpa [#allocation6], 1
    %1254 = vsyncpa [#allocation4], 1

</llo_original>
